<compile_context>
chip_gen: v7x
topology: tpu7x:2x2x1
jax: 0.10.0
libtpu: 0.0.40
codegen_flags: <defaults>
</compile_context>

<pallas_src>
import functools

import jax
import jax.numpy as jnp
from jax.experimental import pallas as pl
from jax.experimental.pallas import tpu as pltpu


def _round_up(n, m):
    return ((n + m - 1) // m) * m


def _default_tanh_dtype():
    """bf16 transcendentals on v6e/v7x; f32 on v5-and-older (no bf16 VPU/EUP path)."""
    try:
        kind = jax.devices()[0].device_kind.lower()
    except Exception:
        return jnp.bfloat16
    if any(tag in kind for tag in ("v2", "v3", "v4", "v5")):
        return jnp.float32
    return jnp.bfloat16


def make_mlp_kernel(apply_tanh, tanh_dtype):
    """Kernel over one batch tile; batch lives on the LANE axis.

    Ref order: x_ref (TB, d_in), w1x/w1s/w1c (hidden0, d_in), b1 (hidden0, 1),
               then (w_i (out,in), b_i (out,1)) for each remaining layer,
               then o_ref (d_out, TB).
    `apply_tanh[i]` is a static Python bool (out_features_i > 1).
    """
    n_layers = len(apply_tanh)

    def _activation(z, i):
        if not apply_tanh[i]:
            return z
        # Hidden layers feeding another matmul: bf16 tanh on v6e/v7x (EUP is the
        # binding unit); final layer (if it has tanh) and v5-class chips stay f32.
        if i < n_layers - 1 and tanh_dtype != jnp.float32:
            return jnp.tanh(z.astype(tanh_dtype))
        return jnp.tanh(z)

    def kernel(*refs):
        x_ref = refs[0]
        w1x_ref, w1s_ref, w1c_ref, b1_ref = refs[1:5]
        o_ref = refs[-1]

        # (TB, d_in) -> (d_in, TB): tiny XLU transpose (XLU slot is idle) so every
        # VPU/EUP op (sin/cos/tanh/bias) below runs on lane-dense vregs.
        xt = jnp.transpose(x_ref[...])                                     # (d_in, TB) f32

        # First layer: split-W1 form of W1 @ [x; sin x; cos x] (no sublane concat).
        z = (jnp.dot(w1x_ref[...], xt, preferred_element_type=jnp.float32)
             + jnp.dot(w1s_ref[...], jnp.sin(xt), preferred_element_type=jnp.float32)
             + jnp.dot(w1c_ref[...], jnp.cos(xt), preferred_element_type=jnp.float32)
             + b1_ref[...])                                                # (h0, TB) f32
        h = _activation(z, 0)

        for i in range(1, n_layers):
            w_ref = refs[5 + 2 * (i - 1)]
            b_ref = refs[6 + 2 * (i - 1)]
            z = jnp.dot(w_ref[...], h, preferred_element_type=jnp.float32) + b_ref[...]
            h = _activation(z, i)

        o_ref[...] = h.astype(o_ref.dtype)                                 # lane-dense store

    return kernel


def prepare_params(weights, biases):
    """One-time layout conversion (call OUTSIDE the hot path).

    weights[i]: (out_i, in_i) float32   (as consumed by F.linear: x @ W.T + b)
    biases[i]:  (out_i,)      float32
    Returns (first_layer=(w1x, w1s, w1c, b1), rest=((w_i, b_i), ...), apply_tanh).
    Weights stay f32 (MXU has huge slack; preserves accuracy).
    """
    w1 = jnp.asarray(weights[0], jnp.float32)
    d_in = w1.shape[1] // 3
    assert w1.shape[1] == 3 * d_in, "first layer must consume hstack([x, sin x, cos x])"
    w1x = w1[:, :d_in]
    w1s = w1[:, d_in:2 * d_in]
    w1c = w1[:, 2 * d_in:]
    b1 = jnp.asarray(biases[0], jnp.float32).reshape(-1, 1)

    rest = tuple(
        (jnp.asarray(w, jnp.float32),
         jnp.asarray(b, jnp.float32).reshape(-1, 1))
        for w, b in zip(weights[1:], biases[1:]))

    # Module guard: `layer.in_features > 1` where in_features attr == W[i].shape[0] == out_i.
    apply_tanh = tuple(int(jnp.asarray(w).shape[0]) > 1 for w in weights)
    return (w1x, w1s, w1c, b1), rest, apply_tanh


def net_forward(x, first_layer, rest, apply_tanh, *, tanh_dtype=None, tile_b_max=4096):
    """x: (B, d_in) float32.  Returns (B, d_out) float32."""
    B, d_in = x.shape
    w1x, w1s, w1c, b1 = first_layer
    d_out = int(rest[-1][0].shape[0]) if rest else int(w1x.shape[0])
    if tanh_dtype is None:
        tanh_dtype = _default_tanh_dtype()

    # tile_b: lane dim of the transposed layout -> must be a multiple of 128.  Cap it so
    # the batch grid has >=4 steps when possible (both v7x TCs get work), while keeping
    # tiles large (per-grid-step overhead ~0.35us; VMEM usage is tiny at these shapes).
    tile_b_max = max(128, (int(tile_b_max) // 128) * 128)
    tile_b = min(tile_b_max, _round_up(max((B + 3) // 4, 1), 128))
    b_pad = _round_up(B, tile_b)

    xp = x.astype(jnp.float32)
    if b_pad != B:
        xp = jnp.pad(xp, ((0, b_pad - B), (0, 0)))   # padded rows produce finite garbage; sliced off

    args = [xp, w1x, w1s, w1c, b1]
    in_specs = [
        pl.BlockSpec((tile_b, d_in), lambda i: (i, 0)),          # x: natural layout, no host transpose
        pl.BlockSpec(w1x.shape, lambda i: (0, 0)),               # params: constant index_map ->
        pl.BlockSpec(w1s.shape, lambda i: (0, 0)),               # DMA'd once, VMEM-resident
        pl.BlockSpec(w1c.shape, lambda i: (0, 0)),
        pl.BlockSpec(b1.shape, lambda i: (0, 0)),
    ]
    for w, b in rest:
        args += [w, b]
        in_specs += [pl.BlockSpec(w.shape, lambda i: (0, 0)),
                     pl.BlockSpec(b.shape, lambda i: (0, 0))]

    kernel = make_mlp_kernel(apply_tanh, tanh_dtype)
    out_t = pl.pallas_call(
        kernel,
        out_shape=jax.ShapeDtypeStruct((d_out, b_pad), jnp.float32),
        grid=(b_pad // tile_b,),
        in_specs=in_specs,
        out_specs=pl.BlockSpec((d_out, tile_b), lambda i: (0, i)),   # lane-dense output store
        compiler_params=pltpu.CompilerParams(
            dimension_semantics=("parallel",)),                      # shard batch across TCs (v7x)
    )(*args)

    return out_t[:, :B].T                                            # (B, d_out); trivial for d_out=1


def net_forward_ref(x, weights, biases):
    """Pure-JAX f32 reference reproducing the PyTorch module's forward."""
    h = jnp.concatenate([x, jnp.sin(x), jnp.cos(x)], axis=-1)
    for w, b in zip(weights, biases):
        w = jnp.asarray(w, jnp.float32)
        b = jnp.asarray(b, jnp.float32).reshape(-1)
        h = h @ w.T + b
        if w.shape[0] > 1:   # layer.in_features attribute == W[i].shape[0]
            h = jnp.tanh(h)
    return h


def init_params(key, layer_dims):
    """Deterministic synthetic weights in (out, in) convention."""
    weights, biases = [], []
    for (d_in, d_out) in layer_dims:
        key, kw, kb = jax.random.split(key, 3)
        scale = 1.0 / jnp.sqrt(jnp.float32(d_in))
        weights.append(jax.random.normal(kw, (d_out, d_in), jnp.float32) * scale)
        biases.append(jax.random.normal(kb, (d_out,), jnp.float32) * 0.1)
    return weights, biases


if __name__ == "__main__":
    key = jax.random.PRNGKey(0)
    key, kx = jax.random.split(key)

    # Small synthetic network consistent with the module:
    # input dim 4 -> hstack gives 12 features -> 12->32 -> 32->32 -> 32->1
    B, D_in, hidden, D_out = 8, 4, 32, 1
    layer_dims = [(3 * D_in, hidden), (hidden, hidden), (hidden, D_out)]

    x = jax.random.normal(kx, (B, D_in), jnp.float32)
    weights, biases = init_params(key, layer_dims)

    # Hoisted one-time parameter layout conversion (split W1, (out,1) biases, f32 weights).
    first_layer, rest, apply_tanh = prepare_params(weights, biases)
    fwd = jax.jit(functools.partial(net_forward, first_layer=first_layer,
                                    rest=rest, apply_tanh=apply_tanh))

    out = jax.block_until_ready(fwd(x))

    ref = net_forward_ref(x, weights, biases)
    assert out.shape == (B, D_out), out.shape
    # f32 matmuls; only hidden-layer tanh may run in bf16 on v6e/v7x -> tight-ish tolerance.
    assert jnp.allclose(out, ref, atol=3e-2, rtol=3e-2), (out, ref)

    print("KERNEL_OK")
</pallas_src>

<mosaic_0001>
module attributes {stable_mosaic.version = 11 : i64} {
  func.func @kernel(%arg0: i32, %arg1: memref<128x4xf32, #tpu.memory_space<vmem>>, %arg2: memref<32x4xf32, #tpu.memory_space<vmem>>, %arg3: memref<32x4xf32, #tpu.memory_space<vmem>>, %arg4: memref<32x4xf32, #tpu.memory_space<vmem>>, %arg5: memref<32x1xf32, #tpu.memory_space<vmem>>, %arg6: memref<32x32xf32, #tpu.memory_space<vmem>>, %arg7: memref<32x1xf32, #tpu.memory_space<vmem>>, %arg8: memref<1x32xf32, #tpu.memory_space<vmem>>, %arg9: memref<1x1xf32, #tpu.memory_space<vmem>>, %arg10: memref<1x128xf32, #tpu.memory_space<vmem>>) attributes {dimension_semantics = [#tpu.dimension_semantics<parallel>], iteration_bounds = array<i64: 1>, scalar_prefetch = 0 : i64, scratch_operands = 0 : i64, tpu.core_type = #tpu.core_type<tc>, window_params = [{transform_indices = @transform_0, window_bounds = array<i64: 128, 4>}, {pipeline_mode = #tpu.pipeline_mode<synchronous>, transform_indices = @transform_1, window_bounds = array<i64: 32, 4>}, {pipeline_mode = #tpu.pipeline_mode<synchronous>, transform_indices = @transform_2, window_bounds = array<i64: 32, 4>}, {pipeline_mode = #tpu.pipeline_mode<synchronous>, transform_indices = @transform_3, window_bounds = array<i64: 32, 4>}, {pipeline_mode = #tpu.pipeline_mode<synchronous>, transform_indices = @transform_4, window_bounds = array<i64: 32, 1>}, {pipeline_mode = #tpu.pipeline_mode<synchronous>, transform_indices = @transform_5, window_bounds = array<i64: 32, 32>}, {pipeline_mode = #tpu.pipeline_mode<synchronous>, transform_indices = @transform_6, window_bounds = array<i64: 32, 1>}, {pipeline_mode = #tpu.pipeline_mode<synchronous>, transform_indices = @transform_7, window_bounds = array<i64: 1, 32>}, {pipeline_mode = #tpu.pipeline_mode<synchronous>, transform_indices = @transform_8, window_bounds = array<i64: 1, 1>}, {transform_indices = @transform_9, window_bounds = array<i64: 1, 128>}]} {
    %c0 = arith.constant 0 : index
    %c0_0 = arith.constant 0 : index
    %0 = vector.load %arg1[%c0, %c0_0] : memref<128x4xf32, #tpu.memory_space<vmem>>, vector<128x4xf32>
    %1 = tpu.transpose %0, [1, 0] : vector<128x4xf32> -> vector<4x128xf32>
    %c0_1 = arith.constant 0 : index
    %c0_2 = arith.constant 0 : index
    %2 = vector.load %arg2[%c0_1, %c0_2] : memref<32x4xf32, #tpu.memory_space<vmem>>, vector<32x4xf32>
    %cst = arith.constant dense<0.000000e+00> : vector<32x128xf32>
    %3 = tpu.matmul %2, %1, %cst {dimension_numbers = #tpu.dot_dimension_numbers<[1], [0], [0], [1], [0, 0, 1, 1], [], []>} : vector<32x4xf32>, vector<4x128xf32>, vector<32x128xf32> -> vector<32x128xf32>
    %c0_3 = arith.constant 0 : index
    %c0_4 = arith.constant 0 : index
    %4 = vector.load %arg3[%c0_3, %c0_4] : memref<32x4xf32, #tpu.memory_space<vmem>>, vector<32x4xf32>
    %5 = math.sin %1 : vector<4x128xf32>
    %cst_5 = arith.constant dense<0.000000e+00> : vector<32x128xf32>
    %6 = tpu.matmul %4, %5, %cst_5 {dimension_numbers = #tpu.dot_dimension_numbers<[1], [0], [0], [1], [0, 0, 1, 1], [], []>} : vector<32x4xf32>, vector<4x128xf32>, vector<32x128xf32> -> vector<32x128xf32>
    %7 = arith.addf %3, %6 : vector<32x128xf32>
    %c0_6 = arith.constant 0 : index
    %c0_7 = arith.constant 0 : index
    %8 = vector.load %arg4[%c0_6, %c0_7] : memref<32x4xf32, #tpu.memory_space<vmem>>, vector<32x4xf32>
    %9 = math.cos %1 : vector<4x128xf32>
    %cst_8 = arith.constant dense<0.000000e+00> : vector<32x128xf32>
    %10 = tpu.matmul %8, %9, %cst_8 {dimension_numbers = #tpu.dot_dimension_numbers<[1], [0], [0], [1], [0, 0, 1, 1], [], []>} : vector<32x4xf32>, vector<4x128xf32>, vector<32x128xf32> -> vector<32x128xf32>
    %11 = arith.addf %7, %10 : vector<32x128xf32>
    %c0_9 = arith.constant 0 : index
    %c0_10 = arith.constant 0 : index
    %12 = vector.load %arg5[%c0_9, %c0_10] : memref<32x1xf32, #tpu.memory_space<vmem>>, vector<32x1xf32>
    %13 = vector.broadcast %12 : vector<32x1xf32> to vector<32x128xf32>
    %14 = arith.addf %11, %13 : vector<32x128xf32>
    %15 = arith.truncf %14 : vector<32x128xf32> to vector<32x128xbf16>
    %16 = math.tanh %15 : vector<32x128xbf16>
    %c0_11 = arith.constant 0 : index
    %c0_12 = arith.constant 0 : index
    %17 = vector.load %arg6[%c0_11, %c0_12] : memref<32x32xf32, #tpu.memory_space<vmem>>, vector<32x32xf32>
    %cst_13 = arith.constant dense<0.000000e+00> : vector<32x128xf32>
    %18 = tpu.matmul %17, %16, %cst_13 {dimension_numbers = #tpu.dot_dimension_numbers<[1], [0], [0], [1], [0, 0, 1, 1], [], []>} : vector<32x32xf32>, vector<32x128xbf16>, vector<32x128xf32> -> vector<32x128xf32>
    %c0_14 = arith.constant 0 : index
    %c0_15 = arith.constant 0 : index
    %19 = vector.load %arg7[%c0_14, %c0_15] : memref<32x1xf32, #tpu.memory_space<vmem>>, vector<32x1xf32>
    %20 = vector.broadcast %19 : vector<32x1xf32> to vector<32x128xf32>
    %21 = arith.addf %18, %20 : vector<32x128xf32>
    %22 = arith.truncf %21 : vector<32x128xf32> to vector<32x128xbf16>
    %23 = math.tanh %22 : vector<32x128xbf16>
    %c0_16 = arith.constant 0 : index
    %c0_17 = arith.constant 0 : index
    %24 = vector.load %arg8[%c0_16, %c0_17] : memref<1x32xf32, #tpu.memory_space<vmem>>, vector<1x32xf32>
    %cst_18 = arith.constant dense<0.000000e+00> : vector<1x128xf32>
    %25 = tpu.matmul %24, %23, %cst_18 {dimension_numbers = #tpu.dot_dimension_numbers<[1], [0], [0], [1], [0, 0, 1, 1], [], []>} : vector<1x32xf32>, vector<32x128xbf16>, vector<1x128xf32> -> vector<1x128xf32>
    %c0_19 = arith.constant 0 : index
    %c0_20 = arith.constant 0 : index
    %26 = vector.load %arg9[%c0_19, %c0_20] : memref<1x1xf32, #tpu.memory_space<vmem>>, vector<1x1xf32>
    %27 = vector.broadcast %26 : vector<1x1xf32> to vector<1x128xf32>
    %28 = arith.addf %25, %27 : vector<1x128xf32>
    %c0_21 = arith.constant 0 : index
    %c0_22 = arith.constant 0 : index
    %29 = vector.load %arg10[%c0_21, %c0_22] : memref<1x128xf32, #tpu.memory_space<vmem>>, vector<1x128xf32>
    tpu.vector_store %arg10[%c0_21, %c0_22], %28 {strides = array<i32>} : memref<1x128xf32, #tpu.memory_space<vmem>>, vector<1x128xf32>,
    return
  }
  func.func @transform_0(%arg0: i32) -> (i32, i32) {
    %c0_i32 = arith.constant 0 : i32
    %c0_i32_0 = arith.constant 0 : i32
    return %arg0, %c0_i32 : i32, i32
  }
  func.func @transform_1(%arg0: i32) -> (i32, i32) {
    %c0_i32 = arith.constant 0 : i32
    %c0_i32_0 = arith.constant 0 : i32
    %c0_i32_1 = arith.constant 0 : i32
    return %c0_i32, %c0_i32_0 : i32, i32
  }
  func.func @transform_2(%arg0: i32) -> (i32, i32) {
    %c0_i32 = arith.constant 0 : i32
    %c0_i32_0 = arith.constant 0 : i32
    %c0_i32_1 = arith.constant 0 : i32
    return %c0_i32, %c0_i32_0 : i32, i32
  }
  func.func @transform_3(%arg0: i32) -> (i32, i32) {
    %c0_i32 = arith.constant 0 : i32
    %c0_i32_0 = arith.constant 0 : i32
    %c0_i32_1 = arith.constant 0 : i32
    return %c0_i32, %c0_i32_0 : i32, i32
  }
  func.func @transform_4(%arg0: i32) -> (i32, i32) {
    %c0_i32 = arith.constant 0 : i32
    %c0_i32_0 = arith.constant 0 : i32
    %c0_i32_1 = arith.constant 0 : i32
    return %c0_i32, %c0_i32_0 : i32, i32
  }
  func.func @transform_5(%arg0: i32) -> (i32, i32) {
    %c0_i32 = arith.constant 0 : i32
    %c0_i32_0 = arith.constant 0 : i32
    %c0_i32_1 = arith.constant 0 : i32
    return %c0_i32, %c0_i32_0 : i32, i32
  }
  func.func @transform_6(%arg0: i32) -> (i32, i32) {
    %c0_i32 = arith.constant 0 : i32
    %c0_i32_0 = arith.constant 0 : i32
    %c0_i32_1 = arith.constant 0 : i32
    return %c0_i32, %c0_i32_0 : i32, i32
  }
  func.func @transform_7(%arg0: i32) -> (i32, i32) {
    %c0_i32 = arith.constant 0 : i32
    %c0_i32_0 = arith.constant 0 : i32
    %c0_i32_1 = arith.constant 0 : i32
    return %c0_i32, %c0_i32_0 : i32, i32
  }
  func.func @transform_8(%arg0: i32) -> (i32, i32) {
    %c0_i32 = arith.constant 0 : i32
    %c0_i32_0 = arith.constant 0 : i32
    %c0_i32_1 = arith.constant 0 : i32
    return %c0_i32, %c0_i32_0 : i32, i32
  }
  func.func @transform_9(%arg0: i32) -> (i32, i32) {
    %c0_i32 = arith.constant 0 : i32
    %c0_i32_0 = arith.constant 0 : i32
    return %c0_i32, %arg0 : i32, i32
  }
}

</mosaic_0001>

<llo_original>
// kernel: net_forward.1
$region0: #{net_forward.1}
  #allocation0 [shape = 'u32[]', space=smem, size = 0x4, offset = 0x4, fixed_abs, tag = 'smem constant byte address 0x4 - core index']
  #allocation1 [shape = 'u32[144,128]{1,0:T(1,128)}', space=vmem, size = 0x12000, scoped, tag = 'internal scratch']
  #allocation2 [shape = 'f32[1,1]{1,0:T(1,128)S(1)}', space=vmem, size = 0x200, scoped, tag = 'scoped memory for net_forward.1']
  %s0 = inlined_call_operand.vmem [shape: f32[128,4], index: 0, kind: input, shape index: {}]
  %s1 = inlined_call_operand.hbm [shape: f32[32,4], index: 1, kind: input, shape index: {}]
  %s2 = inlined_call_operand.hbm [shape: f32[32,4], index: 2, kind: input, shape index: {}]
  %s3 = inlined_call_operand.vmem [shape: f32[32,4], index: 3, kind: input, shape index: {}]
  %s4 = inlined_call_operand.vmem [shape: f32[32,1], index: 4, kind: input, shape index: {}]
  %s5 = inlined_call_operand.vmem [shape: f32[32,32], index: 5, kind: input, shape index: {}]
  %s6 = inlined_call_operand.vmem [shape: f32[32,1], index: 6, kind: input, shape index: {}]
  %s7 = inlined_call_operand.vmem [shape: f32[1,32], index: 7, kind: input, shape index: {}]
  %s8 = inlined_call_operand.<no memory space> [shape: f32[1,1], index: 8, kind: input, shape index: {}]
  %s9 = inlined_call_operand.vmem [shape: f32[1,128], index: 9, kind: output, shape index: {}]
  %s10 = sld [smem:[#allocation0]]
  $region54: #{net_forward.1} parent=0
    _
  %s12 = ssub.s32 1, %s10
  %s13 = scalar_select 0, %s12, %s10
  %v14 = vstv %s8
  %15 = vst [vmem:[#allocation2] sm:$0x1] %v14
  $region1: #{net_forward.1} parent=0
    #allocation3 [shape = 'u8[16384]{0}', space=vmem, size = 0x4000, scoped, tag = 'input window, operand 1, single buffered']
    #allocation4 [shape = 's32[1]{0}', space=sflag, size = 0x4, scoped, tag = 'scoped memory for net_forward.1']
    #allocation5 [shape = 'u8[16384]{0}', space=vmem, size = 0x4000, scoped, tag = 'input window, operand 2, single buffered']
    #allocation6 [shape = 's32[1]{0}', space=sflag, size = 0x4, scoped, tag = 'scoped memory for net_forward.1']
    %16 = vsyncpa [#allocation4], 0
    %17 = vsyncpa [#allocation6], 0
    // Predicated region
    $region2: #{net_forward.1} parent=1 // pred_check
      _
    $region3: #{net_forward.1} parent=1 // pred_check_branch
      %19 = sbr.rel (0) target = $region5
    $region4: #{net_forward.1} parent=1 // pred_region
      _
    $region5: #{net_forward.1} parent=1 // pred_fallthru
      _
    // Predicated region
    $region6: #{net_forward.1} parent=1 // pred_check
      _
    $region7: #{net_forward.1} parent=1 // pred_check_branch
      %21 = sbr.rel (0) target = $region9
    $region8: #{net_forward.1} parent=1 // pred_region
      %s23 = ssub.s32 512, 512
      %24 = vsyncadd [#allocation4], %s23
      %s25 = sshll.u32 [#allocation3], 4
      %s26 = int_to_ptr.vmem [resolvable:$true] %s25
      %31 = dma.hbm_to_vmem [thread:$0]  %s1, 512, %s26, [#allocation4], 128, 128, 8
    $region9: #{net_forward.1} parent=1 // pred_fallthru
      _
    // Predicated region
    $region10: #{net_forward.1} parent=1 // pred_check
      _
    $region11: #{net_forward.1} parent=1 // pred_check_branch
      %33 = sbr.rel (0) target = $region13
    $region12: #{net_forward.1} parent=1 // pred_region
      %s35 = ssub.s32 512, 512
      %36 = vsyncadd [#allocation6], %s35
      %s37 = sshll.u32 [#allocation5], 4
      %s38 = int_to_ptr.vmem [resolvable:$true] %s37
      %43 = dma.hbm_to_vmem [thread:$0]  %s2, 512, %s38, [#allocation6], 128, 128, 8
    $region13: #{net_forward.1} parent=1 // pred_fallthru
      _
    // Predicated region
    $region14: #{net_forward.1} parent=1 // pred_check
      _
    $region15: #{net_forward.1} parent=1 // pred_check_branch
      %45 = sbr.rel (0) target = $region17
    $region16: #{net_forward.1} parent=1 // pred_region
      _
    $region17: #{net_forward.1} parent=1 // pred_fallthru
      _
    // Predicated region
    $region18: #{net_forward.1} parent=1 // pred_check
      _
    $region19: #{net_forward.1} parent=1 // pred_check_branch
      %47 = sbr.rel (0) target = $region21
    $region20: #{net_forward.1} parent=1 // pred_region
      _
    $region21: #{net_forward.1} parent=1 // pred_fallthru
      _
    // Predicated region
    $region22: #{net_forward.1} parent=1 // pred_check
      _
    $region23: #{net_forward.1} parent=1 // pred_check_branch
      %49 = sbr.rel (0) target = $region25
    $region24: #{net_forward.1} parent=1 // pred_region
      _
    $region25: #{net_forward.1} parent=1 // pred_fallthru
      _
    // Predicated region
    $region26: #{net_forward.1} parent=1 // pred_check
      _
    $region27: #{net_forward.1} parent=1 // pred_check_branch
      %51 = sbr.rel (0) target = $region29
    $region28: #{net_forward.1} parent=1 // pred_region
      _
    $region29: #{net_forward.1} parent=1 // pred_fallthru
      _
    // Predicated region
    $region30: #{net_forward.1} parent=1 // pred_check
      _
    $region31: #{net_forward.1} parent=1 // pred_check_branch
      %53 = sbr.rel (0) target = $region33
    $region32: #{net_forward.1} parent=1 // pred_region
      _
    $region33: #{net_forward.1} parent=1 // pred_fallthru
      _
    // Predicated region
    $region34: #{net_forward.1} parent=1 // pred_check
      _
    $region35: #{net_forward.1} parent=1 // pred_check_branch
      %55 = sbr.rel (0) target = $region37
    $region36: #{net_forward.1} parent=1 // pred_region
      _
    $region37: #{net_forward.1} parent=1 // pred_fallthru
      _
    // Predicated region
    $region38: #{net_forward.1} parent=1 // pred_check
      _
    $region39: #{net_forward.1} parent=1 // pred_check_branch
      %57 = sbr.rel (0) target = $region41
    $region40: #{net_forward.1} parent=1 // pred_region
      %58 = dma.done [#allocation4], 512
    $region41: #{net_forward.1} parent=1 // pred_fallthru
      _
    // Predicated region
    $region42: #{net_forward.1} parent=1 // pred_check
      _
    $region43: #{net_forward.1} parent=1 // pred_check_branch
      %60 = sbr.rel (0) target = $region45
    $region44: #{net_forward.1} parent=1 // pred_region
      %61 = dma.done [#allocation6], 512
    $region45: #{net_forward.1} parent=1 // pred_fallthru
      _
    %v63 = vld [vmem:[%s0] sm:$0xff]
    %v64 = vld [vmem:[%s0 + $0x8] sm:$0xff]
    %v65 = vld [vmem:[%s0 + $0x10] sm:$0xff]
    %v66 = vld [vmem:[%s0 + $0x18] sm:$0xff]
    %v67 = vld [vmem:[%s0 + $0x20] sm:$0xff]
    %v68 = vld [vmem:[%s0 + $0x28] sm:$0xff]
    %v69 = vld [vmem:[%s0 + $0x30] sm:$0xff]
    %v70 = vld [vmem:[%s0 + $0x38] sm:$0xff]
    %v71 = vld [vmem:[%s0 + $0x40] sm:$0xff]
    %v72 = vld [vmem:[%s0 + $0x48] sm:$0xff]
    %v73 = vld [vmem:[%s0 + $0x50] sm:$0xff]
    %v74 = vld [vmem:[%s0 + $0x58] sm:$0xff]
    %v75 = vld [vmem:[%s0 + $0x60] sm:$0xff]
    %v76 = vld [vmem:[%s0 + $0x68] sm:$0xff]
    %v77 = vld [vmem:[%s0 + $0x70] sm:$0xff]
    %v78 = vld [vmem:[%s0 + $0x78] sm:$0xff]
    %79 = vxpose.xlu0.b32.start [1/16] %v63, 128
    %80 = vxpose.xlu0.b32.cont [2/16] %v64, 128
    %81 = vxpose.xlu0.b32.cont [3/16] %v65, 128
    %82 = vxpose.xlu0.b32.cont [4/16] %v66, 128
    %83 = vxpose.xlu0.b32.cont [5/16] %v67, 128
    %84 = vxpose.xlu0.b32.cont [6/16] %v68, 128
    %85 = vxpose.xlu0.b32.cont [7/16] %v69, 128
    %86 = vxpose.xlu0.b32.cont [8/16] %v70, 128
    %87 = vxpose.xlu0.b32.cont [9/16] %v71, 128
    %88 = vxpose.xlu0.b32.cont [10/16] %v72, 128
    %89 = vxpose.xlu0.b32.cont [11/16] %v73, 128
    %90 = vxpose.xlu0.b32.cont [12/16] %v74, 128
    %91 = vxpose.xlu0.b32.cont [13/16] %v75, 128
    %92 = vxpose.xlu0.b32.cont [14/16] %v76, 128
    %93 = vxpose.xlu0.b32.cont [15/16] %v77, 128
    %94 = vxpose.xlu0.b32.end [16/16] %v78, 128
    %v95 = vpop.trf.xlu0
    %v96 = vpop.trf.xlu0
    %v97 = vpop.trf.xlu0
    %v98 = vpop.trf.xlu0
    %v99 = vpop.trf.xlu0
    %v100 = vpop.trf.xlu0
    %v101 = vpop.trf.xlu0
    %v102 = vpop.trf.xlu0
    %v103 = vpop.trf.xlu0
    %v104 = vpop.trf.xlu0
    %v105 = vpop.trf.xlu0
    %v106 = vpop.trf.xlu0
    %v107 = vpop.trf.xlu0
    %v108 = vpop.trf.xlu0
    %v109 = vpop.trf.xlu0
    %v110 = vpop.trf.xlu0
    %v111 = vld [vmem:[#allocation3] sm:$0xff]
    %v112 = vld [vmem:[#allocation3 + $0x8] sm:$0xff]
    %v113 = vld [vmem:[#allocation3 + $0x10] sm:$0xff]
    %v114 = vld [vmem:[#allocation3 + $0x18] sm:$0xff]
    %v115 = vld [vmem:[#allocation5] sm:$0xff]
    %v116 = vld [vmem:[#allocation5 + $0x8] sm:$0xff]
    %v117 = vld [vmem:[#allocation5 + $0x10] sm:$0xff]
    %v118 = vld [vmem:[#allocation5 + $0x18] sm:$0xff]
    %v119 = vand.u32 2147483647, %v95
    %vm120 = vcmp.le.f32.partialorder %v119, 0.7853982
    %vm121 = vcmp.lt.s32.totalorder %v95, 0
    %v122 = vand.u32 %v95, 2139095040
    %v123 = vshrl.u32 %v122, 23
    %v124 = vsub.s32 %v123, 127
    %v125 = vand.u32 2147483647, %v95
    %v126 = vand.u32 %v125, 8388607
    %v127 = vor.u32 %v126, 8388608
    %v128 = vsub.s32 0, %v127
    %v129 = vadd.s32 %v124, 1
    %vm130 = vcmp.gt.s32.totalorder %v129, 0
    %v131 = vsel %vm130, %v129, 0
    %v132 = vshrl.u32 %v131, 5
    %v133 = vand.u32 %v131, 31
    %v134 = vsub.s32 32, %v133
    %v135 = vshrl.u32 683565275, %v134
    %v136 = vshll.u32 683565275, %v133
    %v137 = vshrl.u32 2475754826, %v134
    %v138 = vor.u32 %v136, %v137
    %v139 = vshll.u32 2475754826, %v133
    %v140 = vshrl.u32 2131351028, %v134
    %v141 = vor.u32 %v139, %v140
    %v142 = vshll.u32 2131351028, %v133
    %v143 = vshrl.u32 2102212464, %v134
    %v144 = vor.u32 %v142, %v143
    %v145 = vshll.u32 2102212464, %v133
    %v146 = vshrl.u32 920167782, %v134
    %v147 = vor.u32 %v145, %v146
    %v148 = vshll.u32 920167782, %v133
    %v149 = vshrl.u32 1326507024, %v134
    %v150 = vor.u32 %v148, %v149
    %vm151 = vcmp.lt.s32.totalorder %v132, 1
    %vm152 = vcmp.lt.s32.totalorder %v132, 2
    %vm153 = vcmp.lt.s32.totalorder %v132, 3
    %vm154 = vcmp.lt.s32.totalorder %v132, 4
    %v155 = vsel %vm151, %v135, %v138
    %v156 = vsel %vm154, %v144, 2102212464
    %v157 = vsel %vm153, %v141, %v156
    %v158 = vsel %vm152, %v155, %v157
    %v159 = vsel %vm151, %v138, %v141
    %v160 = vsel %vm154, %v147, 920167782
    %v161 = vsel %vm153, %v144, %v160
    %v162 = vsel %vm152, %v159, %v161
    %v163 = vsel %vm151, %v141, %v144
    %v164 = vsel %vm154, %v150, 1326507024
    %v165 = vsel %vm153, %v147, %v164
    %v166 = vsel %vm152, %v163, %v165
    %v167 = vshll.u32 %v127, 8
    %v168 = vmul.u32.u64.compose %v167, %v166
    %v169 = vextract.low.u32 %v168
    %v170 = vextract.high.u32 %v168
    %v171 = vmul.u32.u64.compose %v167, %v162
    %v172 = vextract.low.u32 %v171
    %v173 = vextract.high.u32 %v171
    %v174 = vmul.u32 %v167, %v158
    %v175 = vadd.s32 %v170, %v172
    %vm176 = vc.u32 %v170, %v172
    %v177 = vadd.s32 %v173, 1
    %v178 = vsel %vm176, %v177, %v173
    %v179 = vadd.s32 %v174, %v178
    %v180 = vadd.s32 %v179, 536870912
    %v181 = vshrl.u32 %v180, 30
    %v182 = vshll.u32 %v181, 30
    %v183 = vsub.s32 %v179, %v182
    %vm184 = vcmp.lt.s32.totalorder %v183, 0
    %v185 = vsub.s32 0, %v183
    %v186 = vsel %vm184, %v185, %v183
    %v187 = vclz %v186
    %v188 = vsub.s32 %v187, 2
    %vm189 = vcmp.gt.s32.totalorder 0, %v188
    %v190 = vsel %vm189, 0, %v188
    %v191 = vsub.s32 32, %v190
    %v192 = vshll.u32 %v183, %v190
    %v193 = vshrl.u32 %v175, %v191
    %v194 = vor.u32 %v192, %v193
    %v195 = vsub.s32 4294967266, %v190
    %v196 = vadd.s32 %v195, 127
    %v197 = vshll.u32 %v196, 23
    %v198 = vor.u32 4788187, %v197
    %v199 = vand.u32 2147483647, %v198
    %v201 = vcvt.s32.f32 %v194
    %v202 = vmul.f32 %v201, %v199
    %v203 = vxor.u32 %v202, 2147483648
    %v204 = vsel %vm121, %v203, %v202
    %v205 = vsub.s32 4, %v181
    %v206 = vsel %vm121, %v205, %v181
    %v207 = vsel %vm120, %v95, %v204
    %v208 = vsel %vm120, 0, %v206
    %v209 = vcosq.f32.pop %v207
    %v210 = vsinq.f32.pop %v207
    %vm211 = vweird.f32 %v95
    %v212 = vadd.s32 %v208, 3
    %v213 = vand.u32 %v212, 3
    %vm214 = vcmp.lt.s32.totalorder %v213, 2
    %vm215 = vcmp.eq.s32.totalorder %v213, 0
    %v216 = vxor.u32 %v210, 2147483648
    %v217 = vsel %vm215, %v209, %v216
    %vm218 = vcmp.eq.s32.totalorder %v213, 2
    %v219 = vxor.u32 %v209, 2147483648
    %v220 = vsel %vm218, %v219, %v210
    %v221 = vsel %vm214, %v217, %v220
    %v222 = vsel %vm211, nan, %v221
    %vm223 = vcmask 31744
    %v225 = vsel %vm223, %v115, 0
    %v228 = vsel %vm223, %v116, 0
    %v231 = vsel %vm223, %v117, 0
    %v234 = vsel %vm223, %v118, 0
    %vm236 = vcmask 1043456
    %v238 = vsel %vm236, %v222, 0
    %240 = vmatprep.subr.mxu0 0.0
    %241 = vmatpush1.msra.mxu0 %v238
    %242 = vmatprep.subr.mxu0 0.0
    %243 = vmatpush1.msra.mxu0 0.0
    %244 = vmatprep.subr.mxu0 0.0
    %245 = vmatpush1.msra.mxu0 0.0
    %246 = vmatprep.subr.mxu0 0.0
    %247 = vmatpush1.msra.mxu0 0.0
    %248 = vmatprep.subr.mxu0 0.0
    %249 = vmatpush1.msra.mxu0 0.0
    %250 = vmatprep.subr.mxu0 0.0
    %251 = vmatpush1.msra.mxu0 0.0
    %252 = vmatprep.subr.mxu0 0.0
    %253 = vmatpush1.msra.mxu0 0.0
    %254 = vmatprep.subr.mxu0 0.0
    %255 = vmatpush1.msra.mxu0 0.0
    %256 = vmatprep.subr.mxu0 0.0
    %257 = vmatpush1.msra.mxu0 0.0
    %258 = vmatprep.subr.mxu0 0.0
    %259 = vmatpush1.msra.mxu0 0.0
    %260 = vmatprep.subr.mxu0 0.0
    %261 = vmatpush1.msra.mxu0 0.0
    %262 = vmatprep.subr.mxu0 0.0
    %263 = vmatpush1.msra.mxu0 0.0
    %264 = vmatprep.subr.mxu0 0.0
    %265 = vmatpush1.msra.mxu0 0.0
    %266 = vmatprep.subr.mxu0 0.0
    %267 = vmatpush1.msra.mxu0 0.0
    %268 = vmatprep.subr.mxu0 0.0
    %269 = vmatpush1.msra.mxu0 0.0
    %270 = vmatprep.subr.mxu0 0.0
    %271 = vmatpush1.msra.mxu0 0.0
    %272 = vmatprep.subr.mxu0 0.0
    %273 = vmatpush1.msra.mxu0 0.0
    %274 = vmatprep.subr.mxu0 0.0
    %275 = vmatpush1.msra.mxu0 0.0
    %276 = vmatprep.subr.mxu0 0.0
    %277 = vmatpush1.msra.mxu0 0.0
    %278 = vmatprep.subr.mxu0 0.0
    %279 = vmatpush1.msra.mxu0 0.0
    %280 = vmatprep.subr.mxu0 0.0
    %281 = vmatpush1.msra.mxu0 0.0
    %282 = vmatprep.subr.mxu0 0.0
    %283 = vmatpush1.msra.mxu0 0.0
    %284 = vmatprep.subr.mxu0 0.0
    %285 = vmatpush1.msra.mxu0 0.0
    %286 = vmatprep.subr.mxu0 0.0
    %287 = vmatpush1.msra.mxu0 0.0
    %288 = vmatprep.subr.mxu0 0.0
    %289 = vmatpush1.msra.mxu0 0.0
    %290 = vmatprep.subr.mxu0 0.0
    %291 = vmatpush1.msra.mxu0 0.0
    %292 = vmatprep.subr.mxu0 0.0
    %293 = vmatpush1.msra.mxu0 0.0
    %294 = vmatprep.subr.mxu0 0.0
    %295 = vmatpush1.msra.mxu0 0.0
    %296 = vmatprep.subr.mxu0 0.0
    %297 = vmatpush1.msra.mxu0 0.0
    %298 = vmatprep.subr.mxu0 0.0
    %299 = vmatpush1.msra.mxu0 0.0
    %300 = vmatprep.subr.mxu0 0.0
    %301 = vmatpush1.msra.mxu0 0.0
    %302 = vmatprep.subr.mxu0 0.0
    %303 = vmatpush1.msra.mxu0 0.0
    %304 = vmatprep.mubr.f32.mxu0 0.0
    %305 = vmatmul.mubr.f32.gmra.mrb[0].mxu0 %v225
    %v306 = vpop.f32.mrb[0].mxu0
    %v307 = vadd.f32 0.0, %v306
    %v308 = vpop.f32.mrb[0].mxu0
    %309 = vmatprep.mubr.f32.mxu0 0.0
    %310 = vmatmul.mubr.f32.gmra.mrb[0].mxu0 %v228
    %v311 = vpop.f32.mrb[0].mxu0
    %v312 = vadd.f32 0.0, %v311
    %v313 = vpop.f32.mrb[0].mxu0
    %314 = vmatprep.mubr.f32.mxu0 0.0
    %315 = vmatmul.mubr.f32.gmra.mrb[0].mxu0 %v231
    %v316 = vpop.f32.mrb[0].mxu0
    %v317 = vadd.f32 0.0, %v316
    %v318 = vpop.f32.mrb[0].mxu0
    %319 = vmatprep.mubr.f32.mxu0 0.0
    %320 = vmatmul.mubr.f32.gmra.mrb[0].mxu0 %v234
    %v321 = vpop.f32.mrb[0].mxu0
    %v322 = vadd.f32 0.0, %v321
    %v323 = vpop.f32.mrb[0].mxu0
    %324 = vdwg.mxu0
    %v326 = vsel %vm223, %v111, 0
    %v329 = vsel %vm223, %v112, 0
    %v332 = vsel %vm223, %v113, 0
    %v335 = vsel %vm223, %v114, 0
    %v338 = vsel %vm236, %v95, 0
    %340 = vmatprep.subr.mxu0 0.0
    %341 = vmatpush1.msra.mxu0 %v338
    %342 = vmatprep.subr.mxu0 0.0
    %343 = vmatpush1.msra.mxu0 0.0
    %344 = vmatprep.subr.mxu0 0.0
    %345 = vmatpush1.msra.mxu0 0.0
    %346 = vmatprep.subr.mxu0 0.0
    %347 = vmatpush1.msra.mxu0 0.0
    %348 = vmatprep.subr.mxu0 0.0
    %349 = vmatpush1.msra.mxu0 0.0
    %350 = vmatprep.subr.mxu0 0.0
    %351 = vmatpush1.msra.mxu0 0.0
    %352 = vmatprep.subr.mxu0 0.0
    %353 = vmatpush1.msra.mxu0 0.0
    %354 = vmatprep.subr.mxu0 0.0
    %355 = vmatpush1.msra.mxu0 0.0
    %356 = vmatprep.subr.mxu0 0.0
    %357 = vmatpush1.msra.mxu0 0.0
    %358 = vmatprep.subr.mxu0 0.0
    %359 = vmatpush1.msra.mxu0 0.0
    %360 = vmatprep.subr.mxu0 0.0
    %361 = vmatpush1.msra.mxu0 0.0
    %362 = vmatprep.subr.mxu0 0.0
    %363 = vmatpush1.msra.mxu0 0.0
    %364 = vmatprep.subr.mxu0 0.0
    %365 = vmatpush1.msra.mxu0 0.0
    %366 = vmatprep.subr.mxu0 0.0
    %367 = vmatpush1.msra.mxu0 0.0
    %368 = vmatprep.subr.mxu0 0.0
    %369 = vmatpush1.msra.mxu0 0.0
    %370 = vmatprep.subr.mxu0 0.0
    %371 = vmatpush1.msra.mxu0 0.0
    %372 = vmatprep.subr.mxu0 0.0
    %373 = vmatpush1.msra.mxu0 0.0
    %374 = vmatprep.subr.mxu0 0.0
    %375 = vmatpush1.msra.mxu0 0.0
    %376 = vmatprep.subr.mxu0 0.0
    %377 = vmatpush1.msra.mxu0 0.0
    %378 = vmatprep.subr.mxu0 0.0
    %379 = vmatpush1.msra.mxu0 0.0
    %380 = vmatprep.subr.mxu0 0.0
    %381 = vmatpush1.msra.mxu0 0.0
    %382 = vmatprep.subr.mxu0 0.0
    %383 = vmatpush1.msra.mxu0 0.0
    %384 = vmatprep.subr.mxu0 0.0
    %385 = vmatpush1.msra.mxu0 0.0
    %386 = vmatprep.subr.mxu0 0.0
    %387 = vmatpush1.msra.mxu0 0.0
    %388 = vmatprep.subr.mxu0 0.0
    %389 = vmatpush1.msra.mxu0 0.0
    %390 = vmatprep.subr.mxu0 0.0
    %391 = vmatpush1.msra.mxu0 0.0
    %392 = vmatprep.subr.mxu0 0.0
    %393 = vmatpush1.msra.mxu0 0.0
    %394 = vmatprep.subr.mxu0 0.0
    %395 = vmatpush1.msra.mxu0 0.0
    %396 = vmatprep.subr.mxu0 0.0
    %397 = vmatpush1.msra.mxu0 0.0
    %398 = vmatprep.subr.mxu0 0.0
    %399 = vmatpush1.msra.mxu0 0.0
    %400 = vmatprep.subr.mxu0 0.0
    %401 = vmatpush1.msra.mxu0 0.0
    %402 = vmatprep.subr.mxu0 0.0
    %403 = vmatpush1.msra.mxu0 0.0
    %404 = vmatprep.mubr.f32.mxu0 0.0
    %405 = vmatmul.mubr.f32.gmra.mrb[0].mxu0 %v326
    %v406 = vpop.f32.mrb[0].mxu0
    %v407 = vadd.f32 %v307, %v406
    %v408 = vpop.f32.mrb[0].mxu0
    %409 = vmatprep.mubr.f32.mxu0 0.0
    %410 = vmatmul.mubr.f32.gmra.mrb[0].mxu0 %v329
    %v411 = vpop.f32.mrb[0].mxu0
    %v412 = vadd.f32 %v312, %v411
    %v413 = vpop.f32.mrb[0].mxu0
    %414 = vmatprep.mubr.f32.mxu0 0.0
    %415 = vmatmul.mubr.f32.gmra.mrb[0].mxu0 %v332
    %v416 = vpop.f32.mrb[0].mxu0
    %v417 = vadd.f32 %v317, %v416
    %v418 = vpop.f32.mrb[0].mxu0
    %419 = vmatprep.mubr.f32.mxu0 0.0
    %420 = vmatmul.mubr.f32.gmra.mrb[0].mxu0 %v335
    %v421 = vpop.f32.mrb[0].mxu0
    %v422 = vadd.f32 %v322, %v421
    %v423 = vpop.f32.mrb[0].mxu0
    %424 = vdwg.mxu0
    %v425 = vld [vmem:[%s3] sm:$0xff]
    %v426 = vld [vmem:[%s3 + $0x8] sm:$0xff]
    %v427 = vld [vmem:[%s3 + $0x10] sm:$0xff]
    %v428 = vld [vmem:[%s3 + $0x18] sm:$0xff]
    %v429 = vand.u32 2147483647, %v95
    %vm430 = vcmp.le.f32.partialorder %v429, 0.7853982
    %vm431 = vcmp.lt.s32.totalorder %v95, 0
    %v432 = vand.u32 %v95, 2139095040
    %v433 = vshrl.u32 %v432, 23
    %v434 = vsub.s32 %v433, 127
    %v435 = vand.u32 2147483647, %v95
    %v436 = vand.u32 %v435, 8388607
    %v437 = vor.u32 %v436, 8388608
    %v438 = vsub.s32 0, %v437
    %v439 = vadd.s32 %v434, 1
    %vm440 = vcmp.gt.s32.totalorder %v439, 0
    %v441 = vsel %vm440, %v439, 0
    %v442 = vshrl.u32 %v441, 5
    %v443 = vand.u32 %v441, 31
    %v444 = vsub.s32 32, %v443
    %v445 = vshrl.u32 683565275, %v444
    %v446 = vshll.u32 683565275, %v443
    %v447 = vshrl.u32 2475754826, %v444
    %v448 = vor.u32 %v446, %v447
    %v449 = vshll.u32 2475754826, %v443
    %v450 = vshrl.u32 2131351028, %v444
    %v451 = vor.u32 %v449, %v450
    %v452 = vshll.u32 2131351028, %v443
    %v453 = vshrl.u32 2102212464, %v444
    %v454 = vor.u32 %v452, %v453
    %v455 = vshll.u32 2102212464, %v443
    %v456 = vshrl.u32 920167782, %v444
    %v457 = vor.u32 %v455, %v456
    %v458 = vshll.u32 920167782, %v443
    %v459 = vshrl.u32 1326507024, %v444
    %v460 = vor.u32 %v458, %v459
    %vm461 = vcmp.lt.s32.totalorder %v442, 1
    %vm462 = vcmp.lt.s32.totalorder %v442, 2
    %vm463 = vcmp.lt.s32.totalorder %v442, 3
    %vm464 = vcmp.lt.s32.totalorder %v442, 4
    %v465 = vsel %vm461, %v445, %v448
    %v466 = vsel %vm464, %v454, 2102212464
    %v467 = vsel %vm463, %v451, %v466
    %v468 = vsel %vm462, %v465, %v467
    %v469 = vsel %vm461, %v448, %v451
    %v470 = vsel %vm464, %v457, 920167782
    %v471 = vsel %vm463, %v454, %v470
    %v472 = vsel %vm462, %v469, %v471
    %v473 = vsel %vm461, %v451, %v454
    %v474 = vsel %vm464, %v460, 1326507024
    %v475 = vsel %vm463, %v457, %v474
    %v476 = vsel %vm462, %v473, %v475
    %v477 = vshll.u32 %v437, 8
    %v478 = vmul.u32.u64.compose %v477, %v476
    %v479 = vextract.low.u32 %v478
    %v480 = vextract.high.u32 %v478
    %v481 = vmul.u32.u64.compose %v477, %v472
    %v482 = vextract.low.u32 %v481
    %v483 = vextract.high.u32 %v481
    %v484 = vmul.u32 %v477, %v468
    %v485 = vadd.s32 %v480, %v482
    %vm486 = vc.u32 %v480, %v482
    %v487 = vadd.s32 %v483, 1
    %v488 = vsel %vm486, %v487, %v483
    %v489 = vadd.s32 %v484, %v488
    %v490 = vadd.s32 %v489, 536870912
    %v491 = vshrl.u32 %v490, 30
    %v492 = vshll.u32 %v491, 30
    %v493 = vsub.s32 %v489, %v492
    %vm494 = vcmp.lt.s32.totalorder %v493, 0
    %v495 = vsub.s32 0, %v493
    %v496 = vsel %vm494, %v495, %v493
    %v497 = vclz %v496
    %v498 = vsub.s32 %v497, 2
    %vm499 = vcmp.gt.s32.totalorder 0, %v498
    %v500 = vsel %vm499, 0, %v498
    %v501 = vsub.s32 32, %v500
    %v502 = vshll.u32 %v493, %v500
    %v503 = vshrl.u32 %v485, %v501
    %v504 = vor.u32 %v502, %v503
    %v505 = vsub.s32 4294967266, %v500
    %v506 = vadd.s32 %v505, 127
    %v507 = vshll.u32 %v506, 23
    %v508 = vor.u32 4788187, %v507
    %v509 = vand.u32 2147483647, %v508
    %v511 = vcvt.s32.f32 %v504
    %v512 = vmul.f32 %v511, %v509
    %v513 = vxor.u32 %v512, 2147483648
    %v514 = vsel %vm431, %v513, %v512
    %v515 = vsub.s32 4, %v491
    %v516 = vsel %vm431, %v515, %v491
    %v517 = vsel %vm430, %v95, %v514
    %v518 = vsel %vm430, 0, %v516
    %v519 = vcosq.f32.pop %v517
    %v520 = vsinq.f32.pop %v517
    %vm521 = vweird.f32 %v95
    %v522 = vand.u32 %v518, 3
    %vm523 = vcmp.lt.s32.totalorder %v522, 2
    %vm524 = vcmp.eq.s32.totalorder %v522, 0
    %v525 = vxor.u32 %v520, 2147483648
    %v526 = vsel %vm524, %v519, %v525
    %vm527 = vcmp.eq.s32.totalorder %v522, 2
    %v528 = vxor.u32 %v519, 2147483648
    %v529 = vsel %vm527, %v528, %v520
    %v530 = vsel %vm523, %v526, %v529
    %v531 = vsel %vm521, nan, %v530
    %v533 = vsel %vm223, %v425, 0
    %v536 = vsel %vm223, %v426, 0
    %v539 = vsel %vm223, %v427, 0
    %v542 = vsel %vm223, %v428, 0
    %v545 = vsel %vm236, %v531, 0
    %547 = vmatprep.subr.mxu0 0.0
    %548 = vmatpush1.msra.mxu0 %v545
    %549 = vmatprep.subr.mxu0 0.0
    %550 = vmatpush1.msra.mxu0 0.0
    %551 = vmatprep.subr.mxu0 0.0
    %552 = vmatpush1.msra.mxu0 0.0
    %553 = vmatprep.subr.mxu0 0.0
    %554 = vmatpush1.msra.mxu0 0.0
    %555 = vmatprep.subr.mxu0 0.0
    %556 = vmatpush1.msra.mxu0 0.0
    %557 = vmatprep.subr.mxu0 0.0
    %558 = vmatpush1.msra.mxu0 0.0
    %559 = vmatprep.subr.mxu0 0.0
    %560 = vmatpush1.msra.mxu0 0.0
    %561 = vmatprep.subr.mxu0 0.0
    %562 = vmatpush1.msra.mxu0 0.0
    %563 = vmatprep.subr.mxu0 0.0
    %564 = vmatpush1.msra.mxu0 0.0
    %565 = vmatprep.subr.mxu0 0.0
    %566 = vmatpush1.msra.mxu0 0.0
    %567 = vmatprep.subr.mxu0 0.0
    %568 = vmatpush1.msra.mxu0 0.0
    %569 = vmatprep.subr.mxu0 0.0
    %570 = vmatpush1.msra.mxu0 0.0
    %571 = vmatprep.subr.mxu0 0.0
    %572 = vmatpush1.msra.mxu0 0.0
    %573 = vmatprep.subr.mxu0 0.0
    %574 = vmatpush1.msra.mxu0 0.0
    %575 = vmatprep.subr.mxu0 0.0
    %576 = vmatpush1.msra.mxu0 0.0
    %577 = vmatprep.subr.mxu0 0.0
    %578 = vmatpush1.msra.mxu0 0.0
    %579 = vmatprep.subr.mxu0 0.0
    %580 = vmatpush1.msra.mxu0 0.0
    %581 = vmatprep.subr.mxu0 0.0
    %582 = vmatpush1.msra.mxu0 0.0
    %583 = vmatprep.subr.mxu0 0.0
    %584 = vmatpush1.msra.mxu0 0.0
    %585 = vmatprep.subr.mxu0 0.0
    %586 = vmatpush1.msra.mxu0 0.0
    %587 = vmatprep.subr.mxu0 0.0
    %588 = vmatpush1.msra.mxu0 0.0
    %589 = vmatprep.subr.mxu0 0.0
    %590 = vmatpush1.msra.mxu0 0.0
    %591 = vmatprep.subr.mxu0 0.0
    %592 = vmatpush1.msra.mxu0 0.0
    %593 = vmatprep.subr.mxu0 0.0
    %594 = vmatpush1.msra.mxu0 0.0
    %595 = vmatprep.subr.mxu0 0.0
    %596 = vmatpush1.msra.mxu0 0.0
    %597 = vmatprep.subr.mxu0 0.0
    %598 = vmatpush1.msra.mxu0 0.0
    %599 = vmatprep.subr.mxu0 0.0
    %600 = vmatpush1.msra.mxu0 0.0
    %601 = vmatprep.subr.mxu0 0.0
    %602 = vmatpush1.msra.mxu0 0.0
    %603 = vmatprep.subr.mxu0 0.0
    %604 = vmatpush1.msra.mxu0 0.0
    %605 = vmatprep.subr.mxu0 0.0
    %606 = vmatpush1.msra.mxu0 0.0
    %607 = vmatprep.subr.mxu0 0.0
    %608 = vmatpush1.msra.mxu0 0.0
    %609 = vmatprep.subr.mxu0 0.0
    %610 = vmatpush1.msra.mxu0 0.0
    %611 = vmatprep.mubr.f32.mxu0 0.0
    %612 = vmatmul.mubr.f32.gmra.mrb[0].mxu0 %v533
    %v613 = vpop.f32.mrb[0].mxu0
    %v614 = vadd.f32 0.0, %v613
    %v615 = vpop.f32.mrb[0].mxu0
    %616 = vmatprep.mubr.f32.mxu0 0.0
    %617 = vmatmul.mubr.f32.gmra.mrb[0].mxu0 %v536
    %v618 = vpop.f32.mrb[0].mxu0
    %v619 = vadd.f32 0.0, %v618
    %v620 = vpop.f32.mrb[0].mxu0
    %621 = vmatprep.mubr.f32.mxu0 0.0
    %622 = vmatmul.mubr.f32.gmra.mrb[0].mxu0 %v539
    %v623 = vpop.f32.mrb[0].mxu0
    %v624 = vadd.f32 0.0, %v623
    %v625 = vpop.f32.mrb[0].mxu0
    %626 = vmatprep.mubr.f32.mxu0 0.0
    %627 = vmatmul.mubr.f32.gmra.mrb[0].mxu0 %v542
    %v628 = vpop.f32.mrb[0].mxu0
    %v629 = vadd.f32 0.0, %v628
    %v630 = vpop.f32.mrb[0].mxu0
    %631 = vdwg.mxu0
    %v632 = vadd.f32 %v407, %v614
    %v633 = vadd.f32 %v412, %v619
    %v634 = vadd.f32 %v417, %v624
    %v635 = vadd.f32 %v422, %v629
    %v636 = vld [vmem:[%s4] sm:$0xff]
    %v637 = vld [vmem:[%s4 + $0x8] sm:$0xff]
    %v638 = vld [vmem:[%s4 + $0x10] sm:$0xff]
    %v639 = vld [vmem:[%s4 + $0x18] sm:$0xff]
    %641 = vset.pattern.permute.xlu0 0
    %642 = vperm.xlu0 %641, %v636
    %v643 = vpop.permute.xlu0 %642
    %646 = vset.pattern.permute.xlu0 0
    %647 = vperm.xlu0 %646, %v637
    %v648 = vpop.permute.xlu0 %647
    %651 = vset.pattern.permute.xlu0 0
    %652 = vperm.xlu0 %651, %v638
    %v653 = vpop.permute.xlu0 %652
    %656 = vset.pattern.permute.xlu0 0
    %657 = vperm.xlu0 %656, %v639
    %v658 = vpop.permute.xlu0 %657
    %v660 = vadd.f32 %v632, %v643
    %v661 = vadd.f32 %v633, %v648
    %v662 = vadd.f32 %v634, %v653
    %v663 = vadd.f32 %v635, %v658
    %v664 = vpack.c.bf16 %v661, %v660
    %v665 = vpack.c.bf16 %v663, %v662
    %v666 = vtanh.bf16.pop %v664
    %v667 = vtanh.bf16.pop %v665
    %v668 = vld [vmem:[%s5] sm:$0xff]
    %v669 = vld [vmem:[%s5 + $0x8] sm:$0xff]
    %v670 = vld [vmem:[%s5 + $0x10] sm:$0xff]
    %v671 = vld [vmem:[%s5 + $0x18] sm:$0xff]
    %v672 = vld [vmem:[%s6] sm:$0xff]
    %v673 = vld [vmem:[%s6 + $0x8] sm:$0xff]
    %v674 = vld [vmem:[%s6 + $0x10] sm:$0xff]
    %v675 = vld [vmem:[%s6 + $0x18] sm:$0xff]
    %677 = vset.pattern.permute.xlu0 0
    %678 = vperm.xlu0 %677, %v672
    %v679 = vpop.permute.xlu0 %678
    %682 = vset.pattern.permute.xlu0 0
    %683 = vperm.xlu0 %682, %v673
    %v684 = vpop.permute.xlu0 %683
    %687 = vset.pattern.permute.xlu0 0
    %688 = vperm.xlu0 %687, %v674
    %v689 = vpop.permute.xlu0 %688
    %692 = vset.pattern.permute.xlu0 0
    %693 = vperm.xlu0 %692, %v675
    %v694 = vpop.permute.xlu0 %693
    %vm696 = vcmask 261120
    %v698 = vsel %vm696, %v668, 0
    %v701 = vsel %vm696, %v669, 0
    %v704 = vsel %vm696, %v670, 0
    %v707 = vsel %vm696, %v671, 0
    %709 = vmatprep.subr.bf16.mxu0 0
    %710 = vmatpush1.bf16.msra.mxu0 %v666
    %711 = vmatprep.subr.bf16.mxu0 0
    %712 = vmatpush1.bf16.msra.mxu0 %v667
    %713 = vmatprep.subr.bf16.mxu0 0
    %714 = vmatpush1.bf16.msra.mxu0 0
    %715 = vmatprep.subr.bf16.mxu0 0
    %716 = vmatpush1.bf16.msra.mxu0 0
    %717 = vmatprep.subr.bf16.mxu0 0
    %718 = vmatpush1.bf16.msra.mxu0 0
    %719 = vmatprep.subr.bf16.mxu0 0
    %720 = vmatpush1.bf16.msra.mxu0 0
    %721 = vmatprep.subr.bf16.mxu0 0
    %722 = vmatpush1.bf16.msra.mxu0 0
    %723 = vmatprep.subr.bf16.mxu0 0
    %724 = vmatpush1.bf16.msra.mxu0 0
    %725 = vmatprep.subr.bf16.mxu0 0
    %726 = vmatpush1.bf16.msra.mxu0 0
    %727 = vmatprep.subr.bf16.mxu0 0
    %728 = vmatpush1.bf16.msra.mxu0 0
    %729 = vmatprep.subr.bf16.mxu0 0
    %730 = vmatpush1.bf16.msra.mxu0 0
    %731 = vmatprep.subr.bf16.mxu0 0
    %732 = vmatpush1.bf16.msra.mxu0 0
    %733 = vmatprep.subr.bf16.mxu0 0
    %734 = vmatpush1.bf16.msra.mxu0 0
    %735 = vmatprep.subr.bf16.mxu0 0
    %736 = vmatpush1.bf16.msra.mxu0 0
    %737 = vmatprep.subr.bf16.mxu0 0
    %738 = vmatpush1.bf16.msra.mxu0 0
    %739 = vmatprep.subr.bf16.mxu0 0
    %740 = vmatpush1.bf16.msra.mxu0 0
    %741 = vmatprep.mubr.f32.mxu0 0.0
    %742 = vmatmul.mubr.f32.gmra.mrb[0].mxu0 %v698
    %v743 = vpop.f32.mrb[0].mxu0
    %v744 = vadd.f32 %v679, %v743
    %v745 = vpop.f32.mrb[0].mxu0
    %746 = vmatprep.mubr.f32.mxu0 0.0
    %747 = vmatmul.mubr.f32.gmra.mrb[0].mxu0 %v701
    %v748 = vpop.f32.mrb[0].mxu0
    %v749 = vadd.f32 %v684, %v748
    %v750 = vpop.f32.mrb[0].mxu0
    %751 = vmatprep.mubr.f32.mxu0 0.0
    %752 = vmatmul.mubr.f32.gmra.mrb[0].mxu0 %v704
    %v753 = vpop.f32.mrb[0].mxu0
    %v754 = vadd.f32 %v689, %v753
    %v755 = vpop.f32.mrb[0].mxu0
    %756 = vmatprep.mubr.f32.mxu0 0.0
    %757 = vmatmul.mubr.f32.gmra.mrb[0].mxu0 %v707
    %v758 = vpop.f32.mrb[0].mxu0
    %v759 = vadd.f32 %v694, %v758
    %v760 = vpop.f32.mrb[0].mxu0
    %761 = vdwg.mxu0
    %v762 = vpack.c.bf16 %v749, %v744
    %v763 = vpack.c.bf16 %v759, %v754
    %v764 = vtanh.bf16.pop %v762
    %v765 = vtanh.bf16.pop %v763
    %v766 = vld [vmem:[%s7] sm:$0x1]
    %v767 = vld [vmem:[#allocation2] sm:$0x1]
    %769 = vset.pattern.permute.xlu0 0
    %770 = vperm.xlu0 %769, %v767
    %v771 = vpop.permute.xlu0 %770
    %v773 = vlaneseq
    %v774 = vshrl.u32 %v773, 7
    %v775 = vsub.s32 0, %v774
    %v776 = vrot.slane %v771, %v775
    %v778 = vsel %vm696, %v766, 0
    %780 = vmatprep.subr.bf16.mxu0 0
    %781 = vmatpush1.bf16.msra.mxu0 %v764
    %782 = vmatprep.subr.bf16.mxu0 0
    %783 = vmatpush1.bf16.msra.mxu0 %v765
    %784 = vmatprep.subr.bf16.mxu0 0
    %785 = vmatpush1.bf16.msra.mxu0 0
    %786 = vmatprep.subr.bf16.mxu0 0
    %787 = vmatpush1.bf16.msra.mxu0 0
    %788 = vmatprep.subr.bf16.mxu0 0
    %789 = vmatpush1.bf16.msra.mxu0 0
    %790 = vmatprep.subr.bf16.mxu0 0
    %791 = vmatpush1.bf16.msra.mxu0 0
    %792 = vmatprep.subr.bf16.mxu0 0
    %793 = vmatpush1.bf16.msra.mxu0 0
    %794 = vmatprep.subr.bf16.mxu0 0
    %795 = vmatpush1.bf16.msra.mxu0 0
    %796 = vmatprep.subr.bf16.mxu0 0
    %797 = vmatpush1.bf16.msra.mxu0 0
    %798 = vmatprep.subr.bf16.mxu0 0
    %799 = vmatpush1.bf16.msra.mxu0 0
    %800 = vmatprep.subr.bf16.mxu0 0
    %801 = vmatpush1.bf16.msra.mxu0 0
    %802 = vmatprep.subr.bf16.mxu0 0
    %803 = vmatpush1.bf16.msra.mxu0 0
    %804 = vmatprep.subr.bf16.mxu0 0
    %805 = vmatpush1.bf16.msra.mxu0 0
    %806 = vmatprep.subr.bf16.mxu0 0
    %807 = vmatpush1.bf16.msra.mxu0 0
    %808 = vmatprep.subr.bf16.mxu0 0
    %809 = vmatpush1.bf16.msra.mxu0 0
    %810 = vmatprep.subr.bf16.mxu0 0
    %811 = vmatpush1.bf16.msra.mxu0 0
    %812 = vmatprep.mubr.f32.mxu0 0.0
    %813 = vmatmul.mubr.f32.gmra.mrb[0].mxu0 %v778
    %v814 = vpop.f32.mrb[0].mxu0
    %v815 = vadd.f32 %v776, %v814
    %v816 = vpop.f32.mrb[0].mxu0
    %817 = vdwg.mxu0
    %818 = vst [vmem:[%s9] sm:$0x1] %v815
    // Predicated region
    $region46: #{net_forward.1} parent=1 // pred_check
      _
    $region47: #{net_forward.1} parent=1 // pred_check_branch
      %820 = sbr.rel (0) target = $region49
    $region48: #{net_forward.1} parent=1 // pred_region
      _
    $region49: #{net_forward.1} parent=1 // pred_fallthru
      _
    // Predicated region
    $region50: #{net_forward.1} parent=1 // pred_check
      _
    $region51: #{net_forward.1} parent=1 // pred_check_branch
      %822 = sbr.rel (0) target = $region53
    $region52: #{net_forward.1} parent=1 // pred_region
      _
    $region53: #{net_forward.1} parent=1 // pred_fallthru
      _
    %823 = vsyncpa [#allocation4], 1
    %824 = vsyncpa [#allocation6], 1

</llo_original>
